<compile_context>
chip_gen: v7x
topology: tpu7x:2x2x1
jax: 0.10.0
libtpu: 0.0.40
codegen_flags: <defaults>
</compile_context>

<pallas_src>
import jax
import jax.numpy as jnp
from jax.experimental import pallas as pl
from jax.experimental.pallas import tpu as pltpu

_LANE = 128      # vreg lane width: hidden/output feature dims padded to multiples of this
_SUBLANE = 16    # batch tile granularity (safe for both f32 and bf16 layouts)


def _round_up(x, m):
  return ((x + m - 1) // m) * m


def _pad_to(a, shape):
  pads = [(0, t - s) for s, t in zip(a.shape, shape)]
  if all(p == (0, 0) for p in pads):
    return a
  return jnp.pad(a, pads)


def _tensorcore_count():
  """Best-effort TensorCores-per-chip query (v7x has 2; v5e/v6e have 1)."""
  try:
    info = pltpu.get_tpu_info()
    for name in ("num_cores", "core_count", "tensorcore_count",
                 "num_tensorcores", "num_cores_per_chip"):
      v = getattr(info, name, None)
      if v:
        return int(v)
  except Exception:
    pass
  try:
    dev = jax.devices()[0]
    for name in ("num_cores", "core_count"):
      v = getattr(dev, name, None)
      if isinstance(v, int) and v > 0:
        return v
  except Exception:
    pass
  return 1


def _default_vmem_limit():
  """Chip-aware VMEM budget: most of physical VMEM minus headroom."""
  try:
    cap = int(pltpu.get_tpu_info().vmem_capacity_bytes)
    return max(32 << 20, min(cap - (16 << 20), 112 << 20))
  except Exception:
    return 48 << 20   # conservative fallback that fits every generation


def _make_beta_projection_kernel(n_total):
  """Fused MLP with n_total linear layers; layers 0..n_total-2 get ReLU.

  Ref order: e, r, W1e, W1r, b1, [W_i, b_i for remaining layers], out.
  The regularizer's +1.0 is folded into the last bias, so only clamp remains.
  """

  def kernel(*refs):
    e_ref, r_ref = refs[0], refs[1]
    o_ref = refs[-1]
    w1e_ref, w1r_ref, b1_ref = refs[2], refs[3], refs[4]
    rest = refs[5:-1]                       # [(W2,b2), ..., (W0,b0)] flattened
    cd = w1e_ref.dtype                      # MXU compute dtype (bf16 or f32)

    # ---- layer 1: concat([e, r]) @ W1 expressed as two dots into one f32 acc.
    x = jnp.dot(e_ref[...].astype(cd), w1e_ref[...],
                preferred_element_type=jnp.float32)
    x = x + jnp.dot(r_ref[...].astype(cd), w1r_ref[...],
                    preferred_element_type=jnp.float32)
    x = x + b1_ref[...]
    x = jnp.maximum(x, 0.0)                 # layer 1 is always a hidden layer

    # ---- layers 2..num_layers (hidden, ReLU) and layer 0 (output).
    for i in range(n_total - 1):
      w_ref, b_ref = rest[2 * i], rest[2 * i + 1]
      # cast the inter-layer activation to the compute dtype (halves spill traffic)
      x = jnp.dot(x.astype(cd), w_ref[...],
                  preferred_element_type=jnp.float32) + b_ref[...]
      if i < n_total - 2:
        x = jnp.maximum(x, 0.0)

    # projection_regularizer: clamp(x + 1.0, 0.05, 1e9); +1.0 already in the bias.
    o_ref[...] = jnp.clip(x, 0.05, 1e9).astype(o_ref.dtype)

  return kernel


def prepare_beta_projection_params(layers, entity_dim, relation_dim, *,
                                   compute_dtype=jnp.bfloat16):
  """One-time parameter prep (hoisted out of the per-call path).

  layers: [(W1, b1), ..., (WN, bN), (W0, b0)] with W stored as (in, out); all but
  the last layer get a ReLU. Splits W1 into the e / r halves, zero-pads hidden and
  output dims to multiples of 128, casts weights to compute_dtype, keeps biases in
  f32, and folds the regularizer's +1.0 into the last bias.
  """
  n_total = len(layers)
  assert n_total >= 2, "BetaProjection has at least layer1 and layer0"
  w1, b1 = layers[0]
  assert w1.shape[0] == entity_dim + relation_dim
  hidden = w1.shape[1]
  out_dim = layers[-1][0].shape[1]
  Hp = _round_up(hidden, _LANE)
  Ep = _round_up(out_dim, _LANE)

  w1e = _pad_to(w1[:entity_dim], (entity_dim, Hp)).astype(compute_dtype)
  w1r = _pad_to(w1[entity_dim:], (relation_dim, Hp)).astype(compute_dtype)
  b1p = _pad_to(jnp.asarray(b1).reshape(1, -1), (1, Hp)).astype(jnp.float32)

  rest = []
  for i, (w, b) in enumerate(layers[1:], start=1):
    is_last = (i == n_total - 1)
    out_p = Ep if is_last else Hp
    b = jnp.asarray(b).reshape(1, -1).astype(jnp.float32)
    if is_last:
      b = b + 1.0              # fold regularizer's +1.0 into the output bias
    rest.append((_pad_to(w, (Hp, out_p)).astype(compute_dtype),
                 _pad_to(b, (1, out_p)).astype(jnp.float32)))

  return {
      "n_total": n_total,
      "entity_dim": entity_dim,
      "relation_dim": relation_dim,
      "out_dim": out_dim,
      "w1e": w1e, "w1r": w1r, "b1": b1p,
      "rest": rest,
  }


def beta_projection(e_emb, r_emb, prepared, *, tile_b=256, out_dtype=None,
                    vmem_limit_bytes=None):
  """Fused BetaProjection forward using parameters from prepare_beta_projection_params."""
  B, E = e_emb.shape
  _, R = r_emb.shape
  assert E == prepared["entity_dim"] and R == prepared["relation_dim"]
  out_dim = prepared["out_dim"]
  out_dtype = out_dtype or e_emb.dtype
  n_total = prepared["n_total"]

  w1e, w1r, b1 = prepared["w1e"], prepared["w1r"], prepared["b1"]
  rest = prepared["rest"]
  Hp = w1e.shape[1]
  Ep = rest[-1][0].shape[1]

  # ---- chip-aware batch tiling: big tiles amortize per-step overhead and fill the
  # ---- MXU M dim; only force a multi-tile grid when the chip has >1 TensorCore.
  n_tc = _tensorcore_count()
  tile_b = max(_SUBLANE, _round_up(min(int(tile_b), B), _SUBLANE))
  grid_b = pl.cdiv(B, tile_b)
  if n_tc > 1 and grid_b < n_tc and B > _SUBLANE:
    grid_b = n_tc
    tile_b = max(_SUBLANE, _round_up(pl.cdiv(B, grid_b), _SUBLANE))
    grid_b = pl.cdiv(B, tile_b)
  Bp = tile_b * grid_b

  # Only wrapper-side copy left: batch pad (no-op when B % tile_b == 0). Feature
  # dims stay unpadded and in the caller's dtype; the kernel casts in vregs.
  e_p = _pad_to(e_emb, (Bp, E))
  r_p = _pad_to(r_emb, (Bp, R))

  def batch_spec(dim):
    return pl.BlockSpec((tile_b, dim), lambda i: (i, 0))

  def resident_spec(shape):
    # Full-array block + constant index_map: DMA'd once, resident in VMEM.
    # Single-buffered (no point double-buffering a block that never changes).
    idx = lambda i: (0,) * len(shape)
    try:
      return pl.BlockSpec(shape, idx, pipeline_mode=pl.Buffered(1))
    except Exception:
      return pl.BlockSpec(shape, idx)

  in_specs = [batch_spec(E), batch_spec(R),
              resident_spec(w1e.shape), resident_spec(w1r.shape),
              resident_spec(b1.shape)]
  flat_args = [e_p, r_p, w1e, w1r, b1]
  for (w, b) in rest:
    in_specs += [resident_spec(w.shape), resident_spec(b.shape)]
    flat_args += [w, b]

  if vmem_limit_bytes is None:
    vmem_limit_bytes = _default_vmem_limit()

  # Advisory cost hint so XLA can overlap the kernel with surrounding ops.
  flops = 2 * Bp * (E * Hp + R * Hp + (n_total - 2) * Hp * Hp + Hp * Ep)
  bytes_accessed = (sum(a.size * a.dtype.itemsize for a in flat_args)
                    + Bp * Ep * jnp.dtype(out_dtype).itemsize)

  out = pl.pallas_call(
      _make_beta_projection_kernel(n_total),
      out_shape=jax.ShapeDtypeStruct((Bp, Ep), out_dtype),
      grid_spec=pltpu.PrefetchScalarGridSpec(
          num_scalar_prefetch=0,
          grid=(grid_b,),
          in_specs=in_specs,
          out_specs=batch_spec(Ep),     # Ep is a multiple of 128 -> lane-dense stores
      ),
      compiler_params=pltpu.CompilerParams(
          dimension_semantics=("parallel",),
          vmem_limit_bytes=int(vmem_limit_bytes),
      ),
      cost_estimate=pl.CostEstimate(flops=flops, transcendentals=0,
                                    bytes_accessed=bytes_accessed),
  )(*flat_args)

  # TODO(synk): at production sizes (hidden ~800-1600) on v7x, additionally split the
  # largest layer's output dim across an extra "arbitrary" grid axis if resident
  # weights + activations approach ~56 MiB.
  return out[:B, :out_dim]


# ----------------------------- parameters & reference -----------------------------

def make_params(key, entity_dim, relation_dim, hidden_dim, num_layers=2):
  """PyTorch-equivalent init. Returns [(W1,b1),...,(WN,bN),(W0,b0)], W stored (in,out)."""
  dims = [(entity_dim + relation_dim, hidden_dim)]
  for _ in range(num_layers - 1):
    dims.append((hidden_dim, hidden_dim))
  dims.append((hidden_dim, entity_dim))
  layers = []
  for (fan_in, fan_out) in dims:
    key, kw, kb = jax.random.split(key, 3)
    limit = (6.0 / (fan_in + fan_out)) ** 0.5          # xavier_uniform_, gain=1
    w = jax.random.uniform(kw, (fan_in, fan_out), jnp.float32, -limit, limit)
    bound = 1.0 / fan_in ** 0.5                        # nn.Linear default bias init
    b = jax.random.uniform(kb, (1, fan_out), jnp.float32, -bound, bound)
    layers.append((w, b))
  return layers


def reference(e_emb, r_emb, layers):
  """Pure-JAX f32 reference matching the PyTorch forward."""
  x = jnp.concatenate([e_emb, r_emb], axis=-1)
  for i, (w, b) in enumerate(layers):
    x = x @ w + b
    if i < len(layers) - 1:
      x = jnp.maximum(x, 0.0)
  return jnp.clip(x + 1.0, 0.05, 1e9)


if __name__ == "__main__":
  entity_dim, relation_dim, hidden_dim = 32, 32, 64
  batch, num_layers = 8, 2

  key = jax.random.PRNGKey(0)
  kp, ke, kr = jax.random.split(key, 3)
  layers = make_params(kp, entity_dim, relation_dim, hidden_dim, num_layers)
  e_emb = jax.random.normal(ke, (batch, entity_dim), jnp.float32)
  r_emb = jax.random.normal(kr, (batch, relation_dim), jnp.float32)

  ref = reference(e_emb, r_emb, layers)

  # f32 compute path: should match the reference tightly.
  params_f32 = prepare_beta_projection_params(layers, entity_dim, relation_dim,
                                               compute_dtype=jnp.float32)
  out_f32 = jax.block_until_ready(beta_projection(e_emb, r_emb, params_f32))
  assert out_f32.shape == (batch, entity_dim)
  assert jnp.allclose(out_f32, ref, atol=1e-4, rtol=1e-4), "f32 kernel mismatch"

  # bf16 MXU path (default): f32 accumulation / bias / clamp, looser tolerance.
  params_bf16 = prepare_beta_projection_params(layers, entity_dim, relation_dim)
  out_bf16 = jax.block_until_ready(beta_projection(e_emb, r_emb, params_bf16))
  assert out_bf16.shape == (batch, entity_dim)
  assert jnp.allclose(out_bf16, ref, atol=5e-2, rtol=5e-2), "bf16 kernel mismatch"

  print("KERNEL_OK")
</pallas_src>

<mosaic_0001>
module attributes {stable_mosaic.version = 11 : i64} {
  func.func @kernel(%arg0: i32, %arg1: memref<16x32xf32, #tpu.memory_space<vmem>>, %arg2: memref<16x32xf32, #tpu.memory_space<vmem>>, %arg3: memref<32x128xf32, #tpu.memory_space<vmem>>, %arg4: memref<32x128xf32, #tpu.memory_space<vmem>>, %arg5: memref<1x128xf32, #tpu.memory_space<vmem>>, %arg6: memref<128x128xf32, #tpu.memory_space<vmem>>, %arg7: memref<1x128xf32, #tpu.memory_space<vmem>>, %arg8: memref<128x128xf32, #tpu.memory_space<vmem>>, %arg9: memref<1x128xf32, #tpu.memory_space<vmem>>, %arg10: memref<16x128xf32, #tpu.memory_space<vmem>>) attributes {dimension_semantics = [#tpu.dimension_semantics<parallel>], iteration_bounds = array<i64: 1>, scalar_prefetch = 0 : i64, scratch_operands = 0 : i64, tpu.core_type = #tpu.core_type<tc>, window_params = [{transform_indices = @transform_0, window_bounds = array<i64: 16, 32>}, {transform_indices = @transform_1, window_bounds = array<i64: 16, 32>}, {pipeline_mode = #tpu.pipeline_mode<synchronous>, transform_indices = @transform_2, window_bounds = array<i64: 32, 128>}, {pipeline_mode = #tpu.pipeline_mode<synchronous>, transform_indices = @transform_3, window_bounds = array<i64: 32, 128>}, {pipeline_mode = #tpu.pipeline_mode<synchronous>, transform_indices = @transform_4, window_bounds = array<i64: 1, 128>}, {pipeline_mode = #tpu.pipeline_mode<synchronous>, transform_indices = @transform_5, window_bounds = array<i64: 128, 128>}, {pipeline_mode = #tpu.pipeline_mode<synchronous>, transform_indices = @transform_6, window_bounds = array<i64: 1, 128>}, {pipeline_mode = #tpu.pipeline_mode<synchronous>, transform_indices = @transform_7, window_bounds = array<i64: 128, 128>}, {pipeline_mode = #tpu.pipeline_mode<synchronous>, transform_indices = @transform_8, window_bounds = array<i64: 1, 128>}, {transform_indices = @transform_9, window_bounds = array<i64: 16, 128>}]} {
    %c0 = arith.constant 0 : index
    %c0_0 = arith.constant 0 : index
    %0 = vector.load %arg1[%c0, %c0_0] : memref<16x32xf32, #tpu.memory_space<vmem>>, vector<16x32xf32>
    %c0_1 = arith.constant 0 : index
    %c0_2 = arith.constant 0 : index
    %1 = vector.load %arg3[%c0_1, %c0_2] : memref<32x128xf32, #tpu.memory_space<vmem>>, vector<32x128xf32>
    %cst = arith.constant dense<0.000000e+00> : vector<16x128xf32>
    %2 = tpu.matmul %0, %1, %cst {dimension_numbers = #tpu.dot_dimension_numbers<[1], [0], [0], [1], [0, 0, 1, 1], [], []>} : vector<16x32xf32>, vector<32x128xf32>, vector<16x128xf32> -> vector<16x128xf32>
    %c0_3 = arith.constant 0 : index
    %c0_4 = arith.constant 0 : index
    %3 = vector.load %arg2[%c0_3, %c0_4] : memref<16x32xf32, #tpu.memory_space<vmem>>, vector<16x32xf32>
    %c0_5 = arith.constant 0 : index
    %c0_6 = arith.constant 0 : index
    %4 = vector.load %arg4[%c0_5, %c0_6] : memref<32x128xf32, #tpu.memory_space<vmem>>, vector<32x128xf32>
    %cst_7 = arith.constant dense<0.000000e+00> : vector<16x128xf32>
    %5 = tpu.matmul %3, %4, %cst_7 {dimension_numbers = #tpu.dot_dimension_numbers<[1], [0], [0], [1], [0, 0, 1, 1], [], []>} : vector<16x32xf32>, vector<32x128xf32>, vector<16x128xf32> -> vector<16x128xf32>
    %6 = arith.addf %2, %5 : vector<16x128xf32>
    %c0_8 = arith.constant 0 : index
    %c0_9 = arith.constant 0 : index
    %7 = vector.load %arg5[%c0_8, %c0_9] : memref<1x128xf32, #tpu.memory_space<vmem>>, vector<1x128xf32>
    %8 = vector.broadcast %7 : vector<1x128xf32> to vector<16x128xf32>
    %9 = arith.addf %6, %8 : vector<16x128xf32>
    %cst_10 = arith.constant 0.000000e+00 : f32
    %10 = vector.broadcast %cst_10 : f32 to vector<16x128xf32>
    %11 = arith.maximumf %9, %10 : vector<16x128xf32>
    %c0_11 = arith.constant 0 : index
    %c0_12 = arith.constant 0 : index
    %12 = vector.load %arg6[%c0_11, %c0_12] : memref<128x128xf32, #tpu.memory_space<vmem>>, vector<128x128xf32>
    %cst_13 = arith.constant dense<0.000000e+00> : vector<16x128xf32>
    %13 = tpu.matmul %11, %12, %cst_13 {dimension_numbers = #tpu.dot_dimension_numbers<[1], [0], [0], [1], [0, 0, 1, 1], [], []>} : vector<16x128xf32>, vector<128x128xf32>, vector<16x128xf32> -> vector<16x128xf32>
    %c0_14 = arith.constant 0 : index
    %c0_15 = arith.constant 0 : index
    %14 = vector.load %arg7[%c0_14, %c0_15] : memref<1x128xf32, #tpu.memory_space<vmem>>, vector<1x128xf32>
    %15 = vector.broadcast %14 : vector<1x128xf32> to vector<16x128xf32>
    %16 = arith.addf %13, %15 : vector<16x128xf32>
    %cst_16 = arith.constant 0.000000e+00 : f32
    %17 = vector.broadcast %cst_16 : f32 to vector<16x128xf32>
    %18 = arith.maximumf %16, %17 : vector<16x128xf32>
    %c0_17 = arith.constant 0 : index
    %c0_18 = arith.constant 0 : index
    %19 = vector.load %arg8[%c0_17, %c0_18] : memref<128x128xf32, #tpu.memory_space<vmem>>, vector<128x128xf32>
    %cst_19 = arith.constant dense<0.000000e+00> : vector<16x128xf32>
    %20 = tpu.matmul %18, %19, %cst_19 {dimension_numbers = #tpu.dot_dimension_numbers<[1], [0], [0], [1], [0, 0, 1, 1], [], []>} : vector<16x128xf32>, vector<128x128xf32>, vector<16x128xf32> -> vector<16x128xf32>
    %c0_20 = arith.constant 0 : index
    %c0_21 = arith.constant 0 : index
    %21 = vector.load %arg9[%c0_20, %c0_21] : memref<1x128xf32, #tpu.memory_space<vmem>>, vector<1x128xf32>
    %22 = vector.broadcast %21 : vector<1x128xf32> to vector<16x128xf32>
    %23 = arith.addf %20, %22 : vector<16x128xf32>
    %cst_22 = arith.constant 5.000000e-02 : f32
    %cst_23 = arith.constant 1.000000e+09 : f32
    %24 = vector.broadcast %cst_22 : f32 to vector<16x128xf32>
    %25 = arith.maximumf %24, %23 : vector<16x128xf32>
    %26 = vector.broadcast %cst_23 : f32 to vector<16x128xf32>
    %27 = arith.minimumf %26, %25 : vector<16x128xf32>
    %c0_24 = arith.constant 0 : index
    %c0_25 = arith.constant 0 : index
    %28 = vector.load %arg10[%c0_24, %c0_25] : memref<16x128xf32, #tpu.memory_space<vmem>>, vector<16x128xf32>
    tpu.vector_store %arg10[%c0_24, %c0_25], %27 {strides = array<i32>} : memref<16x128xf32, #tpu.memory_space<vmem>>, vector<16x128xf32>,
    return
  }
  func.func @transform_0(%arg0: i32) -> (i32, i32) {
    %c0_i32 = arith.constant 0 : i32
    %c0_i32_0 = arith.constant 0 : i32
    return %arg0, %c0_i32 : i32, i32
  }
  func.func @transform_1(%arg0: i32) -> (i32, i32) {
    %c0_i32 = arith.constant 0 : i32
    %c0_i32_0 = arith.constant 0 : i32
    return %arg0, %c0_i32 : i32, i32
  }
  func.func @transform_2(%arg0: i32) -> (i32, i32) {
    %c0_i32 = arith.constant 0 : i32
    %c0_i32_0 = arith.constant 0 : i32
    %c0_i32_1 = arith.constant 0 : i32
    return %c0_i32, %c0_i32_0 : i32, i32
  }
  func.func @transform_3(%arg0: i32) -> (i32, i32) {
    %c0_i32 = arith.constant 0 : i32
    %c0_i32_0 = arith.constant 0 : i32
    %c0_i32_1 = arith.constant 0 : i32
    return %c0_i32, %c0_i32_0 : i32, i32
  }
  func.func @transform_4(%arg0: i32) -> (i32, i32) {
    %c0_i32 = arith.constant 0 : i32
    %c0_i32_0 = arith.constant 0 : i32
    %c0_i32_1 = arith.constant 0 : i32
    return %c0_i32, %c0_i32_0 : i32, i32
  }
  func.func @transform_5(%arg0: i32) -> (i32, i32) {
    %c0_i32 = arith.constant 0 : i32
    %c0_i32_0 = arith.constant 0 : i32
    %c0_i32_1 = arith.constant 0 : i32
    return %c0_i32, %c0_i32_0 : i32, i32
  }
  func.func @transform_6(%arg0: i32) -> (i32, i32) {
    %c0_i32 = arith.constant 0 : i32
    %c0_i32_0 = arith.constant 0 : i32
    %c0_i32_1 = arith.constant 0 : i32
    return %c0_i32, %c0_i32_0 : i32, i32
  }
  func.func @transform_7(%arg0: i32) -> (i32, i32) {
    %c0_i32 = arith.constant 0 : i32
    %c0_i32_0 = arith.constant 0 : i32
    %c0_i32_1 = arith.constant 0 : i32
    return %c0_i32, %c0_i32_0 : i32, i32
  }
  func.func @transform_8(%arg0: i32) -> (i32, i32) {
    %c0_i32 = arith.constant 0 : i32
    %c0_i32_0 = arith.constant 0 : i32
    %c0_i32_1 = arith.constant 0 : i32
    return %c0_i32, %c0_i32_0 : i32, i32
  }
  func.func @transform_9(%arg0: i32) -> (i32, i32) {
    %c0_i32 = arith.constant 0 : i32
    %c0_i32_0 = arith.constant 0 : i32
    return %arg0, %c0_i32 : i32, i32
  }
}

</mosaic_0001>

<llo_original>
// kernel: tpu_custom_call.1
$region0: #{tpu_custom_call.1}
  #allocation0 [shape = 'u32[]', space=smem, size = 0x4, offset = 0x4, fixed_abs, tag = 'smem constant byte address 0x4 - core index']
  #allocation1 [shape = 'u32[144,128]{1,0:T(1,128)}', space=vmem, size = 0x12000, scoped, tag = 'internal scratch']
  %s0 = inlined_call_operand.hbm [shape: f32[16,32], index: 0, kind: input, shape index: {}]
  %s1 = inlined_call_operand.hbm [shape: f32[16,32], index: 1, kind: input, shape index: {}]
  %s2 = inlined_call_operand.hbm [shape: f32[32,128], index: 2, kind: input, shape index: {}]
  %s3 = inlined_call_operand.hbm [shape: f32[32,128], index: 3, kind: input, shape index: {}]
  %s4 = inlined_call_operand.vmem [shape: f32[1,128], index: 4, kind: input, shape index: {}]
  %s5 = inlined_call_operand.hbm [shape: f32[128,128], index: 5, kind: input, shape index: {}]
  %s6 = inlined_call_operand.vmem [shape: f32[1,128], index: 6, kind: input, shape index: {}]
  %s7 = inlined_call_operand.hbm [shape: f32[128,128], index: 7, kind: input, shape index: {}]
  %s8 = inlined_call_operand.vmem [shape: f32[1,128], index: 8, kind: input, shape index: {}]
  %s9 = inlined_call_operand.hbm [shape: f32[16,128], index: 9, kind: output, shape index: {}]
  %s10 = sld [smem:[#allocation0]]
  $region70: #{tpu_custom_call.1} parent=0
    _
  %s12 = ssub.s32 1, %s10
  %s13 = scalar_select 0, %s12, %s10
  $region1: #{tpu_custom_call.1} parent=0
    #allocation2 [shape = 'u8[8192]{0}', space=vmem, size = 0x2000, scoped, tag = 'input window, operand 0, single buffered']
    #allocation3 [shape = 's32[1]{0}', space=sflag, size = 0x4, scoped, tag = 'scoped memory for tpu_custom_call.1']
    #allocation4 [shape = 's32[1]{0}', space=sflag, size = 0x4, scoped, tag = 'scoped memory for tpu_custom_call.1']
    #allocation5 [shape = 'u8[8192]{0}', space=vmem, size = 0x2000, scoped, tag = 'input window, operand 1, single buffered']
    #allocation6 [shape = 's32[1]{0}', space=sflag, size = 0x4, scoped, tag = 'scoped memory for tpu_custom_call.1']
    #allocation7 [shape = 'u8[16384]{0}', space=vmem, size = 0x4000, scoped, tag = 'input window, operand 2, single buffered']
    #allocation8 [shape = 'u8[16384]{0}', space=vmem, size = 0x4000, scoped, tag = 'input window, operand 3, single buffered']
    #allocation9 [shape = 's32[1]{0}', space=sflag, size = 0x4, scoped, tag = 'scoped memory for tpu_custom_call.1']
    #allocation10 [shape = 'u8[65536]{0}', space=vmem, size = 0x10000, scoped, tag = 'input window, operand 5, single buffered']
    #allocation11 [shape = 'u8[65536]{0}', space=vmem, size = 0x10000, scoped, tag = 'input window, operand 7, single buffered']
    #allocation12 [shape = 's32[1]{0}', space=sflag, size = 0x4, scoped, tag = 'scoped memory for tpu_custom_call.1']
    #allocation13 [shape = 'u8[8192]{0}', space=vmem, size = 0x2000, scoped, tag = 'output window, operand 0, single buffered']
    %14 = vsyncpa [#allocation3], 0
    %15 = vsyncpa [#allocation6], 0
    %16 = vsyncpa [#allocation9], 0
    %17 = vsyncpa [#allocation12], 0
    %18 = vsyncpa [#allocation4], 0
    // Predicated region
    $region2: #{tpu_custom_call.1} parent=1 // pred_check
      _
    $region3: #{tpu_custom_call.1} parent=1 // pred_check_branch
      %20 = sbr.rel (0) target = $region5
    $region4: #{tpu_custom_call.1} parent=1 // pred_region
      %s22 = ssub.s32 256, 256
      %23 = vsyncadd [#allocation3], %s22
      %s24 = sshll.u32 [#allocation2], 4
      %s25 = int_to_ptr.vmem [resolvable:$true] %s24
      %30 = dma.hbm_to_vmem [thread:$0]  %s0, 256, %s25, [#allocation3], 128, 128, 8
    $region5: #{tpu_custom_call.1} parent=1 // pred_fallthru
      _
    // Predicated region
    $region6: #{tpu_custom_call.1} parent=1 // pred_check
      _
    $region7: #{tpu_custom_call.1} parent=1 // pred_check_branch
      %32 = sbr.rel (0) target = $region9
    $region8: #{tpu_custom_call.1} parent=1 // pred_region
      %s34 = ssub.s32 256, 256
      %35 = vsyncadd [#allocation6], %s34
      %s36 = sshll.u32 [#allocation5], 4
      %s37 = int_to_ptr.vmem [resolvable:$true] %s36
      %42 = dma.hbm_to_vmem [thread:$0]  %s1, 256, %s37, [#allocation6], 128, 128, 8
    $region9: #{tpu_custom_call.1} parent=1 // pred_fallthru
      _
    // Predicated region
    $region10: #{tpu_custom_call.1} parent=1 // pred_check
      _
    $region11: #{tpu_custom_call.1} parent=1 // pred_check_branch
      %44 = sbr.rel (0) target = $region13
    $region12: #{tpu_custom_call.1} parent=1 // pred_region
      %s46 = ssub.s32 512, 512
      %47 = vsyncadd [#allocation6], %s46
      %s48 = sshll.u32 [#allocation7], 4
      %s49 = int_to_ptr.vmem [resolvable:$true] %s48
      %54 = dma.hbm_to_vmem [thread:$0]  %s2, 512, %s49, [#allocation6], 128, 128, 8
    $region13: #{tpu_custom_call.1} parent=1 // pred_fallthru
      _
    // Predicated region
    $region14: #{tpu_custom_call.1} parent=1 // pred_check
      _
    $region15: #{tpu_custom_call.1} parent=1 // pred_check_branch
      %56 = sbr.rel (0) target = $region17
    $region16: #{tpu_custom_call.1} parent=1 // pred_region
      %s58 = ssub.s32 512, 512
      %59 = vsyncadd [#allocation9], %s58
      %s60 = sshll.u32 [#allocation8], 4
      %s61 = int_to_ptr.vmem [resolvable:$true] %s60
      %66 = dma.hbm_to_vmem [thread:$0]  %s3, 512, %s61, [#allocation9], 128, 128, 8
    $region17: #{tpu_custom_call.1} parent=1 // pred_fallthru
      _
    // Predicated region
    $region18: #{tpu_custom_call.1} parent=1 // pred_check
      _
    $region19: #{tpu_custom_call.1} parent=1 // pred_check_branch
      %68 = sbr.rel (0) target = $region21
    $region20: #{tpu_custom_call.1} parent=1 // pred_region
      _
    $region21: #{tpu_custom_call.1} parent=1 // pred_fallthru
      _
    // Predicated region
    $region22: #{tpu_custom_call.1} parent=1 // pred_check
      _
    $region23: #{tpu_custom_call.1} parent=1 // pred_check_branch
      %70 = sbr.rel (0) target = $region25
    $region24: #{tpu_custom_call.1} parent=1 // pred_region
      %s72 = ssub.s32 2048, 2048
      %73 = vsyncadd [#allocation9], %s72
      %s74 = sshll.u32 [#allocation10], 4
      %s75 = int_to_ptr.vmem [resolvable:$true] %s74
      %80 = dma.hbm_to_vmem [thread:$0]  %s5, 2048, %s75, [#allocation9], 128, 128, 8
    $region25: #{tpu_custom_call.1} parent=1 // pred_fallthru
      _
    // Predicated region
    $region26: #{tpu_custom_call.1} parent=1 // pred_check
      _
    $region27: #{tpu_custom_call.1} parent=1 // pred_check_branch
      %82 = sbr.rel (0) target = $region29
    $region28: #{tpu_custom_call.1} parent=1 // pred_region
      _
    $region29: #{tpu_custom_call.1} parent=1 // pred_fallthru
      _
    // Predicated region
    $region30: #{tpu_custom_call.1} parent=1 // pred_check
      _
    $region31: #{tpu_custom_call.1} parent=1 // pred_check_branch
      %84 = sbr.rel (0) target = $region33
    $region32: #{tpu_custom_call.1} parent=1 // pred_region
      %s86 = ssub.s32 2048, 2048
      %87 = vsyncadd [#allocation12], %s86
      %s88 = sshll.u32 [#allocation11], 4
      %s89 = int_to_ptr.vmem [resolvable:$true] %s88
      %94 = dma.hbm_to_vmem [thread:$0]  %s7, 2048, %s89, [#allocation12], 128, 128, 8
    $region33: #{tpu_custom_call.1} parent=1 // pred_fallthru
      _
    // Predicated region
    $region34: #{tpu_custom_call.1} parent=1 // pred_check
      _
    $region35: #{tpu_custom_call.1} parent=1 // pred_check_branch
      %96 = sbr.rel (0) target = $region37
    $region36: #{tpu_custom_call.1} parent=1 // pred_region
      _
    $region37: #{tpu_custom_call.1} parent=1 // pred_fallthru
      _
    // Predicated region
    $region38: #{tpu_custom_call.1} parent=1 // pred_check
      _
    $region39: #{tpu_custom_call.1} parent=1 // pred_check_branch
      %98 = sbr.rel (0) target = $region41
    $region40: #{tpu_custom_call.1} parent=1 // pred_region
      %99 = dma.done [#allocation3], 256
    $region41: #{tpu_custom_call.1} parent=1 // pred_fallthru
      _
    // Predicated region
    $region42: #{tpu_custom_call.1} parent=1 // pred_check
      _
    $region43: #{tpu_custom_call.1} parent=1 // pred_check_branch
      %101 = sbr.rel (0) target = $region45
    $region44: #{tpu_custom_call.1} parent=1 // pred_region
      %102 = dma.done [#allocation6], 256
    $region45: #{tpu_custom_call.1} parent=1 // pred_fallthru
      _
    // Predicated region
    $region46: #{tpu_custom_call.1} parent=1 // pred_check
      _
    $region47: #{tpu_custom_call.1} parent=1 // pred_check_branch
      %104 = sbr.rel (0) target = $region49
    $region48: #{tpu_custom_call.1} parent=1 // pred_region
      %105 = dma.done [#allocation6], 512
    $region49: #{tpu_custom_call.1} parent=1 // pred_fallthru
      _
    // Predicated region
    $region50: #{tpu_custom_call.1} parent=1 // pred_check
      _
    $region51: #{tpu_custom_call.1} parent=1 // pred_check_branch
      %107 = sbr.rel (0) target = $region53
    $region52: #{tpu_custom_call.1} parent=1 // pred_region
      %108 = dma.done [#allocation9], 512
    $region53: #{tpu_custom_call.1} parent=1 // pred_fallthru
      _
    // Predicated region
    $region54: #{tpu_custom_call.1} parent=1 // pred_check
      _
    $region55: #{tpu_custom_call.1} parent=1 // pred_check_branch
      %110 = sbr.rel (0) target = $region57
    $region56: #{tpu_custom_call.1} parent=1 // pred_region
      %111 = dma.done [#allocation9], 2048
    $region57: #{tpu_custom_call.1} parent=1 // pred_fallthru
      _
    // Predicated region
    $region58: #{tpu_custom_call.1} parent=1 // pred_check
      _
    $region59: #{tpu_custom_call.1} parent=1 // pred_check_branch
      %113 = sbr.rel (0) target = $region61
    $region60: #{tpu_custom_call.1} parent=1 // pred_region
      %114 = dma.done [#allocation12], 2048
    $region61: #{tpu_custom_call.1} parent=1 // pred_fallthru
      _
    %v115 = vld [vmem:[#allocation2] sm:$0xff]
    %v116 = vld [vmem:[#allocation2 + $0x8] sm:$0xff]
    %v117 = vld [vmem:[#allocation7] sm:$0xff]
    %v118 = vld [vmem:[#allocation7 + $0x8] sm:$0xff]
    %v119 = vld [vmem:[#allocation7 + $0x10] sm:$0xff]
    %v120 = vld [vmem:[#allocation7 + $0x18] sm:$0xff]
    %v121 = vld [vmem:[#allocation5] sm:$0xff]
    %v122 = vld [vmem:[#allocation5 + $0x8] sm:$0xff]
    %v123 = vld [vmem:[#allocation8] sm:$0xff]
    %v124 = vld [vmem:[#allocation8 + $0x8] sm:$0xff]
    %v125 = vld [vmem:[#allocation8 + $0x10] sm:$0xff]
    %v126 = vld [vmem:[#allocation8 + $0x18] sm:$0xff]
    %vm127 = vcmask 261120
    %v129 = vsel %vm127, %v121, 0
    %v132 = vsel %vm127, %v122, 0
    %134 = vmatprep.subr.mxu0 0.0
    %135 = vmatpush1.msra.mxu0 %v123
    %136 = vmatprep.subr.mxu0 0.0
    %137 = vmatpush1.msra.mxu0 %v124
    %138 = vmatprep.subr.mxu0 0.0
    %139 = vmatpush1.msra.mxu0 %v125
    %140 = vmatprep.subr.mxu0 0.0
    %141 = vmatpush1.msra.mxu0 %v126
    %142 = vmatprep.subr.mxu0 0.0
    %143 = vmatpush1.msra.mxu0 0.0
    %144 = vmatprep.subr.mxu0 0.0
    %145 = vmatpush1.msra.mxu0 0.0
    %146 = vmatprep.subr.mxu0 0.0
    %147 = vmatpush1.msra.mxu0 0.0
    %148 = vmatprep.subr.mxu0 0.0
    %149 = vmatpush1.msra.mxu0 0.0
    %150 = vmatprep.subr.mxu0 0.0
    %151 = vmatpush1.msra.mxu0 0.0
    %152 = vmatprep.subr.mxu0 0.0
    %153 = vmatpush1.msra.mxu0 0.0
    %154 = vmatprep.subr.mxu0 0.0
    %155 = vmatpush1.msra.mxu0 0.0
    %156 = vmatprep.subr.mxu0 0.0
    %157 = vmatpush1.msra.mxu0 0.0
    %158 = vmatprep.subr.mxu0 0.0
    %159 = vmatpush1.msra.mxu0 0.0
    %160 = vmatprep.subr.mxu0 0.0
    %161 = vmatpush1.msra.mxu0 0.0
    %162 = vmatprep.subr.mxu0 0.0
    %163 = vmatpush1.msra.mxu0 0.0
    %164 = vmatprep.subr.mxu0 0.0
    %165 = vmatpush1.msra.mxu0 0.0
    %166 = vmatprep.subr.mxu0 0.0
    %167 = vmatpush1.msra.mxu0 0.0
    %168 = vmatprep.subr.mxu0 0.0
    %169 = vmatpush1.msra.mxu0 0.0
    %170 = vmatprep.subr.mxu0 0.0
    %171 = vmatpush1.msra.mxu0 0.0
    %172 = vmatprep.subr.mxu0 0.0
    %173 = vmatpush1.msra.mxu0 0.0
    %174 = vmatprep.subr.mxu0 0.0
    %175 = vmatpush1.msra.mxu0 0.0
    %176 = vmatprep.subr.mxu0 0.0
    %177 = vmatpush1.msra.mxu0 0.0
    %178 = vmatprep.subr.mxu0 0.0
    %179 = vmatpush1.msra.mxu0 0.0
    %180 = vmatprep.subr.mxu0 0.0
    %181 = vmatpush1.msra.mxu0 0.0
    %182 = vmatprep.subr.mxu0 0.0
    %183 = vmatpush1.msra.mxu0 0.0
    %184 = vmatprep.subr.mxu0 0.0
    %185 = vmatpush1.msra.mxu0 0.0
    %186 = vmatprep.subr.mxu0 0.0
    %187 = vmatpush1.msra.mxu0 0.0
    %188 = vmatprep.subr.mxu0 0.0
    %189 = vmatpush1.msra.mxu0 0.0
    %190 = vmatprep.subr.mxu0 0.0
    %191 = vmatpush1.msra.mxu0 0.0
    %192 = vmatprep.subr.mxu0 0.0
    %193 = vmatpush1.msra.mxu0 0.0
    %194 = vmatprep.subr.mxu0 0.0
    %195 = vmatpush1.msra.mxu0 0.0
    %196 = vmatprep.subr.mxu0 0.0
    %197 = vmatpush1.msra.mxu0 0.0
    %198 = vmatprep.mubr.f32.mxu0 0.0
    %199 = vmatmul.mubr.f32.gmra.mrb[0].mxu0 %v129
    %v200 = vpop.f32.mrb[0].mxu0
    %v201 = vadd.f32 0.0, %v200
    %v202 = vpop.f32.mrb[0].mxu0
    %203 = vmatprep.mubr.f32.mxu0 0.0
    %204 = vmatmul.mubr.f32.gmra.mrb[0].mxu0 %v132
    %v205 = vpop.f32.mrb[0].mxu0
    %v206 = vadd.f32 0.0, %v205
    %v207 = vpop.f32.mrb[0].mxu0
    %208 = vdwg.mxu0
    %v210 = vsel %vm127, %v115, 0
    %v213 = vsel %vm127, %v116, 0
    %215 = vmatprep.subr.mxu0 0.0
    %216 = vmatpush1.msra.mxu0 %v117
    %217 = vmatprep.subr.mxu0 0.0
    %218 = vmatpush1.msra.mxu0 %v118
    %219 = vmatprep.subr.mxu0 0.0
    %220 = vmatpush1.msra.mxu0 %v119
    %221 = vmatprep.subr.mxu0 0.0
    %222 = vmatpush1.msra.mxu0 %v120
    %223 = vmatprep.subr.mxu0 0.0
    %224 = vmatpush1.msra.mxu0 0.0
    %225 = vmatprep.subr.mxu0 0.0
    %226 = vmatpush1.msra.mxu0 0.0
    %227 = vmatprep.subr.mxu0 0.0
    %228 = vmatpush1.msra.mxu0 0.0
    %229 = vmatprep.subr.mxu0 0.0
    %230 = vmatpush1.msra.mxu0 0.0
    %231 = vmatprep.subr.mxu0 0.0
    %232 = vmatpush1.msra.mxu0 0.0
    %233 = vmatprep.subr.mxu0 0.0
    %234 = vmatpush1.msra.mxu0 0.0
    %235 = vmatprep.subr.mxu0 0.0
    %236 = vmatpush1.msra.mxu0 0.0
    %237 = vmatprep.subr.mxu0 0.0
    %238 = vmatpush1.msra.mxu0 0.0
    %239 = vmatprep.subr.mxu0 0.0
    %240 = vmatpush1.msra.mxu0 0.0
    %241 = vmatprep.subr.mxu0 0.0
    %242 = vmatpush1.msra.mxu0 0.0
    %243 = vmatprep.subr.mxu0 0.0
    %244 = vmatpush1.msra.mxu0 0.0
    %245 = vmatprep.subr.mxu0 0.0
    %246 = vmatpush1.msra.mxu0 0.0
    %247 = vmatprep.subr.mxu0 0.0
    %248 = vmatpush1.msra.mxu0 0.0
    %249 = vmatprep.subr.mxu0 0.0
    %250 = vmatpush1.msra.mxu0 0.0
    %251 = vmatprep.subr.mxu0 0.0
    %252 = vmatpush1.msra.mxu0 0.0
    %253 = vmatprep.subr.mxu0 0.0
    %254 = vmatpush1.msra.mxu0 0.0
    %255 = vmatprep.subr.mxu0 0.0
    %256 = vmatpush1.msra.mxu0 0.0
    %257 = vmatprep.subr.mxu0 0.0
    %258 = vmatpush1.msra.mxu0 0.0
    %259 = vmatprep.subr.mxu0 0.0
    %260 = vmatpush1.msra.mxu0 0.0
    %261 = vmatprep.subr.mxu0 0.0
    %262 = vmatpush1.msra.mxu0 0.0
    %263 = vmatprep.subr.mxu0 0.0
    %264 = vmatpush1.msra.mxu0 0.0
    %265 = vmatprep.subr.mxu0 0.0
    %266 = vmatpush1.msra.mxu0 0.0
    %267 = vmatprep.subr.mxu0 0.0
    %268 = vmatpush1.msra.mxu0 0.0
    %269 = vmatprep.subr.mxu0 0.0
    %270 = vmatpush1.msra.mxu0 0.0
    %271 = vmatprep.subr.mxu0 0.0
    %272 = vmatpush1.msra.mxu0 0.0
    %273 = vmatprep.subr.mxu0 0.0
    %274 = vmatpush1.msra.mxu0 0.0
    %275 = vmatprep.subr.mxu0 0.0
    %276 = vmatpush1.msra.mxu0 0.0
    %277 = vmatprep.subr.mxu0 0.0
    %278 = vmatpush1.msra.mxu0 0.0
    %279 = vmatprep.mubr.f32.mxu0 0.0
    %280 = vmatmul.mubr.f32.gmra.mrb[0].mxu0 %v210
    %v281 = vpop.f32.mrb[0].mxu0
    %v282 = vadd.f32 %v201, %v281
    %v283 = vpop.f32.mrb[0].mxu0
    %284 = vmatprep.mubr.f32.mxu0 0.0
    %285 = vmatmul.mubr.f32.gmra.mrb[0].mxu0 %v213
    %v286 = vpop.f32.mrb[0].mxu0
    %v287 = vadd.f32 %v206, %v286
    %v288 = vpop.f32.mrb[0].mxu0
    %289 = vdwg.mxu0
    %v290 = vld [vmem:[%s4] sm:$0x1]
    %v292 = vlaneseq
    %v293 = vshrl.u32 %v292, 7
    %v294 = vsub.s32 0, %v293
    %v295 = vrot.slane %v290, %v294
    %v297 = vadd.f32 %v282, %v295
    %v298 = vadd.f32 %v287, %v295
    %v299 = vmax.f32 %v297, 0.0
    %v300 = vmax.f32 %v298, 0.0
    %v301 = vld [vmem:[#allocation10] sm:$0xff]
    %v302 = vld [vmem:[#allocation10 + $0x8] sm:$0xff]
    %v303 = vld [vmem:[#allocation10 + $0x10] sm:$0xff]
    %v304 = vld [vmem:[#allocation10 + $0x18] sm:$0xff]
    %v305 = vld [vmem:[#allocation10 + $0x20] sm:$0xff]
    %v306 = vld [vmem:[#allocation10 + $0x28] sm:$0xff]
    %v307 = vld [vmem:[#allocation10 + $0x30] sm:$0xff]
    %v308 = vld [vmem:[#allocation10 + $0x38] sm:$0xff]
    %v309 = vld [vmem:[#allocation10 + $0x40] sm:$0xff]
    %v310 = vld [vmem:[#allocation10 + $0x48] sm:$0xff]
    %v311 = vld [vmem:[#allocation10 + $0x50] sm:$0xff]
    %v312 = vld [vmem:[#allocation10 + $0x58] sm:$0xff]
    %v313 = vld [vmem:[#allocation10 + $0x60] sm:$0xff]
    %v314 = vld [vmem:[#allocation10 + $0x68] sm:$0xff]
    %v315 = vld [vmem:[#allocation10 + $0x70] sm:$0xff]
    %v316 = vld [vmem:[#allocation10 + $0x78] sm:$0xff]
    %v317 = vld [vmem:[%s6] sm:$0x1]
    %v319 = vlaneseq
    %v320 = vshrl.u32 %v319, 7
    %v321 = vsub.s32 0, %v320
    %v322 = vrot.slane %v317, %v321
    %324 = vmatprep.subr.mxu0 0.0
    %325 = vmatpush1.msra.mxu0 %v301
    %326 = vmatprep.subr.mxu0 0.0
    %327 = vmatpush1.msra.mxu0 %v302
    %328 = vmatprep.subr.mxu0 0.0
    %329 = vmatpush1.msra.mxu0 %v303
    %330 = vmatprep.subr.mxu0 0.0
    %331 = vmatpush1.msra.mxu0 %v304
    %332 = vmatprep.subr.mxu0 0.0
    %333 = vmatpush1.msra.mxu0 %v305
    %334 = vmatprep.subr.mxu0 0.0
    %335 = vmatpush1.msra.mxu0 %v306
    %336 = vmatprep.subr.mxu0 0.0
    %337 = vmatpush1.msra.mxu0 %v307
    %338 = vmatprep.subr.mxu0 0.0
    %339 = vmatpush1.msra.mxu0 %v308
    %340 = vmatprep.subr.mxu0 0.0
    %341 = vmatpush1.msra.mxu0 %v309
    %342 = vmatprep.subr.mxu0 0.0
    %343 = vmatpush1.msra.mxu0 %v310
    %344 = vmatprep.subr.mxu0 0.0
    %345 = vmatpush1.msra.mxu0 %v311
    %346 = vmatprep.subr.mxu0 0.0
    %347 = vmatpush1.msra.mxu0 %v312
    %348 = vmatprep.subr.mxu0 0.0
    %349 = vmatpush1.msra.mxu0 %v313
    %350 = vmatprep.subr.mxu0 0.0
    %351 = vmatpush1.msra.mxu0 %v314
    %352 = vmatprep.subr.mxu0 0.0
    %353 = vmatpush1.msra.mxu0 %v315
    %354 = vmatprep.subr.mxu0 0.0
    %355 = vmatpush1.msra.mxu0 %v316
    %356 = vmatprep.subr.mxu0 0.0
    %357 = vmatpush1.msra.mxu0 0.0
    %358 = vmatprep.subr.mxu0 0.0
    %359 = vmatpush1.msra.mxu0 0.0
    %360 = vmatprep.subr.mxu0 0.0
    %361 = vmatpush1.msra.mxu0 0.0
    %362 = vmatprep.subr.mxu0 0.0
    %363 = vmatpush1.msra.mxu0 0.0
    %364 = vmatprep.subr.mxu0 0.0
    %365 = vmatpush1.msra.mxu0 0.0
    %366 = vmatprep.subr.mxu0 0.0
    %367 = vmatpush1.msra.mxu0 0.0
    %368 = vmatprep.subr.mxu0 0.0
    %369 = vmatpush1.msra.mxu0 0.0
    %370 = vmatprep.subr.mxu0 0.0
    %371 = vmatpush1.msra.mxu0 0.0
    %372 = vmatprep.subr.mxu0 0.0
    %373 = vmatpush1.msra.mxu0 0.0
    %374 = vmatprep.subr.mxu0 0.0
    %375 = vmatpush1.msra.mxu0 0.0
    %376 = vmatprep.subr.mxu0 0.0
    %377 = vmatpush1.msra.mxu0 0.0
    %378 = vmatprep.subr.mxu0 0.0
    %379 = vmatpush1.msra.mxu0 0.0
    %380 = vmatprep.subr.mxu0 0.0
    %381 = vmatpush1.msra.mxu0 0.0
    %382 = vmatprep.subr.mxu0 0.0
    %383 = vmatpush1.msra.mxu0 0.0
    %384 = vmatprep.subr.mxu0 0.0
    %385 = vmatpush1.msra.mxu0 0.0
    %386 = vmatprep.subr.mxu0 0.0
    %387 = vmatpush1.msra.mxu0 0.0
    %388 = vmatprep.mubr.f32.mxu0 0.0
    %389 = vmatmul.mubr.f32.gmra.mrb[0].mxu0 %v299
    %v390 = vpop.f32.mrb[0].mxu0
    %v391 = vadd.f32 %v322, %v390
    %v392 = vpop.f32.mrb[0].mxu0
    %393 = vmatprep.mubr.f32.mxu0 0.0
    %394 = vmatmul.mubr.f32.gmra.mrb[0].mxu0 %v300
    %v395 = vpop.f32.mrb[0].mxu0
    %v396 = vadd.f32 %v322, %v395
    %v397 = vpop.f32.mrb[0].mxu0
    %398 = vdwg.mxu0
    %v399 = vmax.f32 %v391, 0.0
    %v400 = vmax.f32 %v396, 0.0
    %v401 = vld [vmem:[#allocation11] sm:$0xff]
    %v402 = vld [vmem:[#allocation11 + $0x8] sm:$0xff]
    %v403 = vld [vmem:[#allocation11 + $0x10] sm:$0xff]
    %v404 = vld [vmem:[#allocation11 + $0x18] sm:$0xff]
    %v405 = vld [vmem:[#allocation11 + $0x20] sm:$0xff]
    %v406 = vld [vmem:[#allocation11 + $0x28] sm:$0xff]
    %v407 = vld [vmem:[#allocation11 + $0x30] sm:$0xff]
    %v408 = vld [vmem:[#allocation11 + $0x38] sm:$0xff]
    %v409 = vld [vmem:[#allocation11 + $0x40] sm:$0xff]
    %v410 = vld [vmem:[#allocation11 + $0x48] sm:$0xff]
    %v411 = vld [vmem:[#allocation11 + $0x50] sm:$0xff]
    %v412 = vld [vmem:[#allocation11 + $0x58] sm:$0xff]
    %v413 = vld [vmem:[#allocation11 + $0x60] sm:$0xff]
    %v414 = vld [vmem:[#allocation11 + $0x68] sm:$0xff]
    %v415 = vld [vmem:[#allocation11 + $0x70] sm:$0xff]
    %v416 = vld [vmem:[#allocation11 + $0x78] sm:$0xff]
    %v417 = vld [vmem:[%s8] sm:$0x1]
    %v419 = vlaneseq
    %v420 = vshrl.u32 %v419, 7
    %v421 = vsub.s32 0, %v420
    %v422 = vrot.slane %v417, %v421
    %424 = vmatprep.subr.mxu0 0.0
    %425 = vmatpush1.msra.mxu0 %v401
    %426 = vmatprep.subr.mxu0 0.0
    %427 = vmatpush1.msra.mxu0 %v402
    %428 = vmatprep.subr.mxu0 0.0
    %429 = vmatpush1.msra.mxu0 %v403
    %430 = vmatprep.subr.mxu0 0.0
    %431 = vmatpush1.msra.mxu0 %v404
    %432 = vmatprep.subr.mxu0 0.0
    %433 = vmatpush1.msra.mxu0 %v405
    %434 = vmatprep.subr.mxu0 0.0
    %435 = vmatpush1.msra.mxu0 %v406
    %436 = vmatprep.subr.mxu0 0.0
    %437 = vmatpush1.msra.mxu0 %v407
    %438 = vmatprep.subr.mxu0 0.0
    %439 = vmatpush1.msra.mxu0 %v408
    %440 = vmatprep.subr.mxu0 0.0
    %441 = vmatpush1.msra.mxu0 %v409
    %442 = vmatprep.subr.mxu0 0.0
    %443 = vmatpush1.msra.mxu0 %v410
    %444 = vmatprep.subr.mxu0 0.0
    %445 = vmatpush1.msra.mxu0 %v411
    %446 = vmatprep.subr.mxu0 0.0
    %447 = vmatpush1.msra.mxu0 %v412
    %448 = vmatprep.subr.mxu0 0.0
    %449 = vmatpush1.msra.mxu0 %v413
    %450 = vmatprep.subr.mxu0 0.0
    %451 = vmatpush1.msra.mxu0 %v414
    %452 = vmatprep.subr.mxu0 0.0
    %453 = vmatpush1.msra.mxu0 %v415
    %454 = vmatprep.subr.mxu0 0.0
    %455 = vmatpush1.msra.mxu0 %v416
    %456 = vmatprep.subr.mxu0 0.0
    %457 = vmatpush1.msra.mxu0 0.0
    %458 = vmatprep.subr.mxu0 0.0
    %459 = vmatpush1.msra.mxu0 0.0
    %460 = vmatprep.subr.mxu0 0.0
    %461 = vmatpush1.msra.mxu0 0.0
    %462 = vmatprep.subr.mxu0 0.0
    %463 = vmatpush1.msra.mxu0 0.0
    %464 = vmatprep.subr.mxu0 0.0
    %465 = vmatpush1.msra.mxu0 0.0
    %466 = vmatprep.subr.mxu0 0.0
    %467 = vmatpush1.msra.mxu0 0.0
    %468 = vmatprep.subr.mxu0 0.0
    %469 = vmatpush1.msra.mxu0 0.0
    %470 = vmatprep.subr.mxu0 0.0
    %471 = vmatpush1.msra.mxu0 0.0
    %472 = vmatprep.subr.mxu0 0.0
    %473 = vmatpush1.msra.mxu0 0.0
    %474 = vmatprep.subr.mxu0 0.0
    %475 = vmatpush1.msra.mxu0 0.0
    %476 = vmatprep.subr.mxu0 0.0
    %477 = vmatpush1.msra.mxu0 0.0
    %478 = vmatprep.subr.mxu0 0.0
    %479 = vmatpush1.msra.mxu0 0.0
    %480 = vmatprep.subr.mxu0 0.0
    %481 = vmatpush1.msra.mxu0 0.0
    %482 = vmatprep.subr.mxu0 0.0
    %483 = vmatpush1.msra.mxu0 0.0
    %484 = vmatprep.subr.mxu0 0.0
    %485 = vmatpush1.msra.mxu0 0.0
    %486 = vmatprep.subr.mxu0 0.0
    %487 = vmatpush1.msra.mxu0 0.0
    %488 = vmatprep.mubr.f32.mxu0 0.0
    %489 = vmatmul.mubr.f32.gmra.mrb[0].mxu0 %v399
    %v490 = vpop.f32.mrb[0].mxu0
    %v491 = vadd.f32 %v422, %v490
    %v492 = vpop.f32.mrb[0].mxu0
    %493 = vmatprep.mubr.f32.mxu0 0.0
    %494 = vmatmul.mubr.f32.gmra.mrb[0].mxu0 %v400
    %v495 = vpop.f32.mrb[0].mxu0
    %v496 = vadd.f32 %v422, %v495
    %v497 = vpop.f32.mrb[0].mxu0
    %498 = vdwg.mxu0
    %v499 = vmax.f32 %v491, 0.05
    %v500 = vmax.f32 %v496, 0.05
    %v501 = vmin.f32 %v499, 1e+09
    %v502 = vmin.f32 %v500, 1e+09
    %503 = vst [vmem:[#allocation13] sm:$0xff] %v501
    %504 = vst [vmem:[#allocation13 + $0x8] sm:$0xff] %v502
    // Predicated region
    $region62: #{tpu_custom_call.1} parent=1 // pred_check
      _
    $region63: #{tpu_custom_call.1} parent=1 // pred_check_branch
      %506 = sbr.rel (0) target = $region65
    $region64: #{tpu_custom_call.1} parent=1 // pred_region
      %s508 = ssub.s32 256, 256
      %509 = vsyncadd [#allocation4], %s508
      %s510 = sshll.u32 [#allocation13], 4
      %s511 = int_to_ptr.vmem [resolvable:$true] %s510
      %516 = dma.vmem_to_hbm [thread:$0]  %s511, 256, %s9, [#allocation4], 128, 128, 8
    $region65: #{tpu_custom_call.1} parent=1 // pred_fallthru
      _
    // Predicated region
    $region66: #{tpu_custom_call.1} parent=1 // pred_check
      _
    $region67: #{tpu_custom_call.1} parent=1 // pred_check_branch
      %518 = sbr.rel (0) target = $region69
    $region68: #{tpu_custom_call.1} parent=1 // pred_region
      %519 = dma.done [#allocation4], 256
    $region69: #{tpu_custom_call.1} parent=1 // pred_fallthru
      _
    %520 = vsyncpa [#allocation3], 1
    %521 = vsyncpa [#allocation6], 1
    %522 = vsyncpa [#allocation9], 1
    %523 = vsyncpa [#allocation12], 1
    %524 = vsyncpa [#allocation4], 1

</llo_original>
